<compile_context>
chip_gen: v7x
topology: tpu7x:2x2x1
jax: 0.10.0
libtpu: 0.0.40
codegen_flags: <defaults>
</compile_context>

<pallas_src>
import functools

import jax
import jax.numpy as jnp
from jax.experimental import pallas as pl
from jax.experimental.pallas import tpu as pltpu


def _round_up(n, m):
    return ((n + m - 1) // m) * m


def _divisors_desc(n):
    return [d for d in range(n, 0, -1) if n % d == 0]


def _norm_sum_kernel(x_ref, o_ref, *, c_chunk):
    # Block: (Nb, C, T). Normalize along axis 1 (channels).
    nb, C, T = x_ref.shape
    if c_chunk >= C:
        # single-shot path (small / medium C)
        xf = x_ref[...].astype(jnp.float32)              # f32 accumulation
        s = jnp.sum(xf, axis=1, keepdims=True)           # channel sum, keepdim
        inv = pl.reciprocal(s, approx=False)             # exact (meets 1e-6 atol)
        o_ref[...] = (xf * inv).astype(o_ref.dtype)
    else:
        # two-pass chunked path for large C: live f32 temp ~ (Nb, c_chunk, T)
        s = jnp.zeros((nb, 1, T), jnp.float32)
        for c0 in range(0, C, c_chunk):
            c1 = min(c0 + c_chunk, C)
            s = s + jnp.sum(x_ref[:, c0:c1, :].astype(jnp.float32),
                            axis=1, keepdims=True)
        inv = pl.reciprocal(s, approx=False)
        for c0 in range(0, C, c_chunk):
            c1 = min(c0 + c_chunk, C)
            o_ref[:, c0:c1, :] = (
                x_ref[:, c0:c1, :].astype(jnp.float32) * inv
            ).astype(o_ref.dtype)


def _vmem_capacity_bytes():
    try:
        return int(pltpu.get_tpu_info().vmem_capacity_bytes)
    except Exception:
        return 64 * 1024 * 1024  # conservative default (v7x per-TC physical)


def normalized_1_sum(x, dim=1):
    """x: (N, C, H, W). Returns x / x.sum(dim=1, keepdims=True)."""
    assert x.ndim == 4 and dim == 1, "kernel specialized to dim=1 of NCHW"
    N, C, H, W = x.shape
    HW = H * W
    itemsize = jnp.dtype(x.dtype).itemsize

    # ---- generation-aware VMEM budget (total kernel footprint) -------------
    vmem_cap = _vmem_capacity_bytes()               # 128 MiB v5e/v6e, 64 MiB v7x
    budget = min(vmem_cap // 2, 32 * 1024 * 1024)

    # ---- lane-dense HW tiling: pad HW up to a multiple of 128 ---------------
    HW_pad = _round_up(HW, 128)
    t_cands = [128 * d for d in _divisors_desc(HW_pad // 128)]   # descending

    # ---- padded-footprint model ---------------------------------------------
    sublane_mult = 8 * (4 // itemsize)           # 8 (f32), 16 (bf16), 32 (int8)
    c_pad_io = _round_up(C, sublane_mult)        # VMEM tile rounds C up
    c_chunk = C if C < 512 else 256
    c_pad_tmp = _round_up(min(C, c_chunk), 8)    # f32 temps live at 8-row tiles

    def footprint(nb, t):
        io = 2 * 2 * nb * c_pad_io * t * itemsize          # in+out, double-buffered
        tmp = 2 * nb * c_pad_tmp * t * 4 + nb * 8 * t * 4  # f32 temps + inv row
        return io + tmp

    # ---- pick (Nb, tile_hw): biggest block that fits, preferring an even
    #      step count (>=2 / >=4) on non-tiny inputs (v7x 2-TC balance). ------
    total_in_bytes = N * C * HW * itemsize
    if total_in_bytes <= (1 << 20):
        min_steps = 1
    elif total_in_bytes <= (8 << 20):
        min_steps = 2
    else:
        min_steps = 4

    best = None  # ((Nb, tile_hw), (balanced, block_elems))
    for nb in _divisors_desc(N):
        for t in t_cands:
            if footprint(nb, t) > budget:
                continue
            steps = (N // nb) * (HW_pad // t)
            balanced = (min_steps == 1) or (steps >= min_steps and steps % 2 == 0)
            key = (1 if balanced else 0, nb * t)
            if best is None or key > best[1]:
                best = ((nb, t), key)
    if best is None:
        Nb, tile_hw = 1, t_cands[-1]   # minimal block; may exceed nominal budget
    else:
        Nb, tile_hw = best[0]

    grid = (N // Nb, HW_pad // tile_hw)

    # ---- compiler limits & cost hint ----------------------------------------
    need = footprint(Nb, tile_hw)
    vmem_limit = min(
        max(32 * 1024 * 1024, int(need * 1.5) + (2 << 20)),
        max(int(vmem_cap * 0.95), 32 * 1024 * 1024),
    )
    cost = pl.CostEstimate(
        flops=2 * N * C * HW,
        transcendentals=N * HW,
        bytes_accessed=2 * N * C * HW * itemsize,
    )

    # ---- pad flattened spatial axis with 1s (no inf/NaN in dead lanes) ------
    x2 = x.reshape(N, C, HW)
    if HW_pad != HW:
        x2 = jnp.pad(x2, ((0, 0), (0, 0), (0, HW_pad - HW)), constant_values=1)

    out = pl.pallas_call(
        functools.partial(_norm_sum_kernel, c_chunk=c_chunk),
        out_shape=jax.ShapeDtypeStruct((N, C, HW_pad), x.dtype),
        grid_spec=pl.GridSpec(
            grid=grid,
            in_specs=[pl.BlockSpec((Nb, C, tile_hw), lambda n, h: (n, 0, h))],
            out_specs=pl.BlockSpec((Nb, C, tile_hw), lambda n, h: (n, 0, h)),
        ),
        compiler_params=pltpu.CompilerParams(
            dimension_semantics=("parallel", "parallel"),
            vmem_limit_bytes=vmem_limit,
        ),
        cost_estimate=cost,
    )(x2)

    if HW_pad != HW:
        out = out[:, :, :HW]
    return out.reshape(N, C, H, W)


if __name__ == "__main__":
    key = jax.random.PRNGKey(0)
    # small CycleGAN-like feature map: batch=2, channels=4, spatial=16x16
    x = jax.random.uniform(key, (2, 4, 16, 16), dtype=jnp.float32) + 0.1

    y = normalized_1_sum(x, dim=1)
    y = jax.block_until_ready(y)

    # reference check (pure JAX)
    y_ref = x / jnp.sum(x, axis=1, keepdims=True)
    assert jnp.allclose(y, y_ref, atol=1e-6, rtol=1e-6), "mismatch vs reference"
    # normalized channels should sum to 1
    assert jnp.allclose(jnp.sum(y, axis=1), jnp.ones((2, 16, 16)), atol=1e-5)

    print("KERNEL_OK")
</pallas_src>

<mosaic_0001>
module attributes {stable_mosaic.version = 11 : i64} {
  func.func @_norm_sum_kernel(%arg0: i32, %arg1: i32, %arg2: memref<2x4x256xf32, #tpu.memory_space<vmem>>, %arg3: memref<2x4x256xf32, #tpu.memory_space<vmem>>) attributes {dimension_semantics = [#tpu.dimension_semantics<parallel>, #tpu.dimension_semantics<parallel>], iteration_bounds = array<i64: 1, 1>, scalar_prefetch = 0 : i64, scratch_operands = 0 : i64, tpu.core_type = #tpu.core_type<tc>, window_params = [{transform_indices = @transform_0, window_bounds = array<i64: 2, 4, 256>}, {transform_indices = @transform_1, window_bounds = array<i64: 2, 4, 256>}]} {
    %c0 = arith.constant 0 : index
    %c0_0 = arith.constant 0 : index
    %c0_1 = arith.constant 0 : index
    %0 = vector.load %arg2[%c0, %c0_0, %c0_1] : memref<2x4x256xf32, #tpu.memory_space<vmem>>, vector<2x4x256xf32>
    %cst = arith.constant dense<0.000000e+00> : vector<2x256xf32>
    %1 = vector.multi_reduction <add>, %0, %cst [1] : vector<2x4x256xf32> to vector<2x256xf32>
    %2 = vector.shape_cast %1 : vector<2x256xf32> to vector<2x1x256xf32>
    %3 = tpu.reciprocal %2 : vector<2x1x256xf32> -> vector<2x1x256xf32>
    %4 = vector.broadcast %3 : vector<2x1x256xf32> to vector<2x4x256xf32>
    %5 = arith.mulf %0, %4 : vector<2x4x256xf32>
    %c0_2 = arith.constant 0 : index
    %c0_3 = arith.constant 0 : index
    %c0_4 = arith.constant 0 : index
    %6 = vector.load %arg3[%c0_2, %c0_3, %c0_4] : memref<2x4x256xf32, #tpu.memory_space<vmem>>, vector<2x4x256xf32>
    tpu.vector_store %arg3[%c0_2, %c0_3, %c0_4], %5 {strides = array<i32>} : memref<2x4x256xf32, #tpu.memory_space<vmem>>, vector<2x4x256xf32>,
    return
  }
  func.func @transform_0(%arg0: i32, %arg1: i32) -> (i32, i32, i32) {
    %c0_i32 = arith.constant 0 : i32
    %c0_i32_0 = arith.constant 0 : i32
    return %arg0, %c0_i32, %arg1 : i32, i32, i32
  }
  func.func @transform_1(%arg0: i32, %arg1: i32) -> (i32, i32, i32) {
    %c0_i32 = arith.constant 0 : i32
    %c0_i32_0 = arith.constant 0 : i32
    return %arg0, %c0_i32, %arg1 : i32, i32, i32
  }
}

</mosaic_0001>

<llo_original>
// kernel: tpu_custom_call.1
$region0: #{tpu_custom_call.1}
  #allocation0 [shape = 'u32[]', space=smem, size = 0x4, offset = 0x4, fixed_abs, tag = 'smem constant byte address 0x4 - core index']
  #allocation1 [shape = 'u32[144,128]{1,0:T(1,128)}', space=vmem, size = 0x12000, scoped, tag = 'internal scratch']
  %s0 = inlined_call_operand.hbm [shape: f32[2,4,256], index: 0, kind: input, shape index: {}]
  %s1 = inlined_call_operand.hbm [shape: f32[2,4,256], index: 1, kind: output, shape index: {}]
  %s2 = sld [smem:[#allocation0]]
  $region18: #{tpu_custom_call.1} parent=0
    _
  %s4 = ssub.s32 1, %s2
  %s5 = scalar_select 0, %s4, %s2
  $region1: #{tpu_custom_call.1} parent=0
    #allocation2 [shape = 'u8[8192]{0}', space=vmem, size = 0x2000, scoped, tag = 'input window, operand 0, single buffered']
    #allocation3 [shape = 's32[1]{0}', space=sflag, size = 0x4, scoped, tag = 'scoped memory for tpu_custom_call.1']
    #allocation4 [shape = 's32[1]{0}', space=sflag, size = 0x4, scoped, tag = 'scoped memory for tpu_custom_call.1']
    #allocation5 [shape = 'u8[8192]{0}', space=vmem, size = 0x2000, scoped, tag = 'output window, operand 0, single buffered']
    %6 = vsyncpa [#allocation3], 0
    %7 = vsyncpa [#allocation4], 0
    // Predicated region
    $region2: #{tpu_custom_call.1} parent=1 // pred_check
      _
    $region3: #{tpu_custom_call.1} parent=1 // pred_check_branch
      %9 = sbr.rel (0) target = $region5
    $region4: #{tpu_custom_call.1} parent=1 // pred_region
      %s11 = ssub.s32 256, 256
      %12 = vsyncadd [#allocation3], %s11
      %s13 = sshll.u32 [#allocation2], 4
      %s14 = int_to_ptr.vmem [resolvable:$true] %s13
      %19 = dma.hbm_to_vmem [thread:$0]  %s0, 256, %s14, [#allocation3], 128, 128, 8
    $region5: #{tpu_custom_call.1} parent=1 // pred_fallthru
      _
    // Predicated region
    $region6: #{tpu_custom_call.1} parent=1 // pred_check
      _
    $region7: #{tpu_custom_call.1} parent=1 // pred_check_branch
      %21 = sbr.rel (0) target = $region9
    $region8: #{tpu_custom_call.1} parent=1 // pred_region
      %22 = dma.done [#allocation3], 256
    $region9: #{tpu_custom_call.1} parent=1 // pred_fallthru
      _
    %v23 = vld [vmem:[#allocation2] sm:$0xff]
    %v24 = vld [vmem:[#allocation2 + $0x8] sm:$0xff]
    %v27 = vcombine.high %v23, %v23
    %v28 = vcombine.high %v24, %v24
    %vm31 = vcmask 1043456
    %v32 = vsel %vm31, %v23, 0.0
    %v33 = vrot.slane %v32, 4
    %v34 = vadd.f32 %v32, %v33
    %v35 = vrot.slane %v34, 2
    %v36 = vadd.f32 %v34, %v35
    %v37 = vrot.slane %v36, 1
    %v38 = vadd.f32 %v36, %v37
    %v39 = vsel %vm31, %v27, 0.0
    %v40 = vrot.slane %v39, 4
    %v41 = vadd.f32 %v39, %v40
    %v42 = vrot.slane %v41, 2
    %v43 = vadd.f32 %v41, %v42
    %v44 = vrot.slane %v43, 1
    %v45 = vadd.f32 %v43, %v44
    %v46 = vsel %vm31, %v24, 0.0
    %v47 = vrot.slane %v46, 4
    %v48 = vadd.f32 %v46, %v47
    %v49 = vrot.slane %v48, 2
    %v50 = vadd.f32 %v48, %v49
    %v51 = vrot.slane %v50, 1
    %v52 = vadd.f32 %v50, %v51
    %v53 = vsel %vm31, %v28, 0.0
    %v54 = vrot.slane %v53, 4
    %v55 = vadd.f32 %v53, %v54
    %v56 = vrot.slane %v55, 2
    %v57 = vadd.f32 %v55, %v56
    %v58 = vrot.slane %v57, 1
    %v59 = vadd.f32 %v57, %v58
    %v60 = vrcp.pop %v38
    %v61 = vrcp.pop %v45
    %v62 = vrcp.pop %v52
    %v63 = vrcp.pop %v59
    %v68 = vcombine.low %v60, %v61
    %v69 = vcombine.low %v62, %v63
    %v72 = vmul.f32 %v23, %v68
    %v73 = vmul.f32 %v24, %v69
    %74 = vst [vmem:[#allocation5] sm:$0xff] %v72
    %75 = vst [vmem:[#allocation5 + $0x8] sm:$0xff] %v73
    // Predicated region
    $region10: #{tpu_custom_call.1} parent=1 // pred_check
      _
    $region11: #{tpu_custom_call.1} parent=1 // pred_check_branch
      %77 = sbr.rel (0) target = $region13
    $region12: #{tpu_custom_call.1} parent=1 // pred_region
      %s79 = ssub.s32 256, 256
      %80 = vsyncadd [#allocation4], %s79
      %s81 = sshll.u32 [#allocation5], 4
      %s82 = int_to_ptr.vmem [resolvable:$true] %s81
      %87 = dma.vmem_to_hbm [thread:$0]  %s82, 256, %s1, [#allocation4], 128, 128, 8
    $region13: #{tpu_custom_call.1} parent=1 // pred_fallthru
      _
    // Predicated region
    $region14: #{tpu_custom_call.1} parent=1 // pred_check
      _
    $region15: #{tpu_custom_call.1} parent=1 // pred_check_branch
      %89 = sbr.rel (0) target = $region17
    $region16: #{tpu_custom_call.1} parent=1 // pred_region
      %90 = dma.done [#allocation4], 256
    $region17: #{tpu_custom_call.1} parent=1 // pred_fallthru
      _
    %91 = vsyncpa [#allocation3], 1
    %92 = vsyncpa [#allocation4], 1

</llo_original>
